<compile_context>
chip_gen: v5e
topology: v5e:2x2
jax: 0.10.0
libtpu: 0.0.40
codegen_flags: <defaults>
</compile_context>

<pallas_src>
import jax
import jax.numpy as jnp
from jax import lax
from jax.experimental import pallas as pl
from jax.experimental.pallas import tpu as pltpu

GAMMA = 4.7665163962213235


def _rbf_kernel(x_ref, c_ref, sneg_ref, csq_ref, w_ref, b_ref, o_ref):
    # x_ref   : (TN, D) natural-layout batch tile of x
    # c_ref   : (C, D)  centers pre-scaled by (2*gamma/D)
    # sneg_ref: (C, D)  constant filled with (-gamma/D)  (forms ||x||^2 rows)
    # csq_ref : (C, 1)  (-gamma/D) * ||c_i||^2
    # w_ref   : (C, 1)  linear weight
    # b_ref   : (1, 1)  linear bias
    # o_ref   : (1, TN) lane-dense output tile
    x = x_ref[...]                                   # (TN, D) f32
    dn = (((1,), (1,)), ((), ()))                    # contract dim 1 of both: a @ b.T

    # (2*gamma/D) * (c_i . x) -> (C, TN), MXU, true-f32 accumulation.
    cross = lax.dot_general(c_ref[...], x, dn,
                            precision=lax.Precision.HIGHEST,
                            preferred_element_type=jnp.float32)
    # (-gamma/D) * ||x||^2 per column, replicated across the C rows -> (C, TN).
    xsq = lax.dot_general(sneg_ref[...], x * x, dn,
                          precision=lax.Precision.HIGHEST,
                          preferred_element_type=jnp.float32)

    # exponent = -gamma * mean((x - c_i)^2); clamp to <= 0 (mse >= 0) so FP
    # cancellation / unspecified ragged-tail columns can't push exp above 1.
    expo = jnp.minimum(cross + xsq + csq_ref[...], 0.0)       # (C, TN)
    rbf = jnp.exp(expo)                                        # (C, TN)

    # C -> 1 projection: broadcast multiply + sublane reduce (VPU/XLU, no MXU).
    o_ref[...] = jnp.sum(rbf * w_ref[...], axis=0, keepdims=True) + b_ref[...]


def _round_up(v, m):
    return ((v + m - 1) // m) * m


def rbf_network_forward(x, centers, weight, bias, *, max_tile_n=8192):
    """x: (N, D) f32; centers: (C, D) f32; weight: (C, 1) f32; bias: (1, 1) f32
    returns (N, 1) f32 -- equivalent to RBFNetwork.forward(x)."""
    n, d = x.shape
    c = centers.shape[0]

    # Batch tile: big enough that per-step DMA >> ~0.35 us step overhead, small
    # enough for every generation's scoped VMEM on this (TN, D) lane-padded
    # path, and >= ~8 grid steps at large N for v7x's two TensorCores.
    # No wrapper pad: the last tile is ragged and Pallas masks its store.
    if n <= 128:
        tile_n = n                                   # single block == array dims
    else:
        tile_n = max(128, min(max_tile_n, _round_up(pl.cdiv(n, 8), 128)))
    grid = (pl.cdiv(n, tile_n),)

    # Grid-invariant precomputation (hoisted out of the kernel).
    scale = GAMMA / d
    x_f32 = x.astype(jnp.float32)
    centers_f32 = centers.astype(jnp.float32)
    c_scaled = (2.0 * scale) * centers_f32                               # (C, D)
    sneg = jnp.full((c, d), -scale, dtype=jnp.float32)                   # (C, D)
    csq_scaled = (-scale) * jnp.sum(centers_f32 * centers_f32,
                                    axis=1, keepdims=True)               # (C, 1)
    w = weight.astype(jnp.float32).reshape(c, 1)
    b = jnp.asarray(bias, dtype=jnp.float32).reshape(1, 1)

    out = pl.pallas_call(
        _rbf_kernel,
        out_shape=jax.ShapeDtypeStruct((1, n), jnp.float32),
        grid=grid,
        in_specs=[
            pl.BlockSpec((tile_n, d), lambda i: (i, 0)),   # x tile (natural layout)
            pl.BlockSpec((c, d), lambda i: (0, 0)),        # scaled centers
            pl.BlockSpec((c, d), lambda i: (0, 0)),        # -gamma/D constant rows
            pl.BlockSpec((c, 1), lambda i: (0, 0)),        # scaled ||c||^2
            pl.BlockSpec((c, 1), lambda i: (0, 0)),        # linear weight
            pl.BlockSpec((1, 1), lambda i: (0, 0)),        # linear bias
        ],
        out_specs=pl.BlockSpec((1, tile_n), lambda i: (0, i)),
        compiler_params=pltpu.CompilerParams(
            dimension_semantics=("parallel",),
            vmem_limit_bytes=32 * 1024 * 1024,
        ),
    )(x_f32, c_scaled, sneg, csq_scaled, w, b)

    return out.reshape(n, 1)


def _reference(x, centers, weight, bias):
    # Direct translation of the PyTorch loop (pure JAX, elementwise f32 only).
    diffs = x[:, None, :] - centers[None, :, :]              # (N, C, D)
    mse = jnp.mean(diffs * diffs, axis=-1)                   # (N, C)
    rbf = jnp.exp(-GAMMA * mse)                              # (N, C)
    return (jnp.sum(rbf * weight[:, 0][None, :], axis=1, keepdims=True)
            + bias[0, 0])                                    # (N, 1)


if __name__ == "__main__":
    key = jax.random.PRNGKey(0)
    k_x, k_c, k_w, k_b = jax.random.split(key, 4)

    # Small shapes consistent with the module; N deliberately NOT a multiple of
    # the tile size so the ragged-final-block (masked store) path is exercised.
    N, D, C = 1000, 16, 8

    x = jax.random.normal(k_x, (N, D), dtype=jnp.float32)
    centers = jax.random.normal(k_c, (C, D), dtype=jnp.float32)
    # nn.Linear(C, 1): weight (1, C), bias (1,) -- stored here as (C, 1)/(1, 1).
    weight = (jax.random.normal(k_w, (C, 1), dtype=jnp.float32)
              * (1.0 / jnp.sqrt(C)))
    bias = (jax.random.normal(k_b, (1, 1), dtype=jnp.float32)
            * (1.0 / jnp.sqrt(C)))

    out = rbf_network_forward(x, centers, weight, bias)
    out = jax.block_until_ready(out)

    ref = _reference(x, centers, weight, bias)
    assert out.shape == (N, 1)
    max_err = jnp.max(jnp.abs(out - ref))
    assert jnp.allclose(out, ref, rtol=1e-5, atol=1e-5), (
        f"mismatch vs reference (max abs err {max_err})")

    print("KERNEL_OK")
</pallas_src>

<mosaic_0001>
module attributes {stable_mosaic.version = 11 : i64} {
  func.func @_rbf_kernel(%arg0: i32, %arg1: memref<128x16xf32, #tpu.memory_space<vmem>>, %arg2: memref<8x16xf32, #tpu.memory_space<vmem>>, %arg3: memref<8x16xf32, #tpu.memory_space<vmem>>, %arg4: memref<8x1xf32, #tpu.memory_space<vmem>>, %arg5: memref<8x1xf32, #tpu.memory_space<vmem>>, %arg6: memref<1x1xf32, #tpu.memory_space<vmem>>, %arg7: memref<1x128xf32, #tpu.memory_space<vmem>>) attributes {dimension_semantics = [#tpu.dimension_semantics<parallel>], iteration_bounds = array<i64: 8>, scalar_prefetch = 0 : i64, scratch_operands = 0 : i64, tpu.core_type = #tpu.core_type<tc>, window_params = [{transform_indices = @transform_0, window_bounds = array<i64: 128, 16>}, {pipeline_mode = #tpu.pipeline_mode<synchronous>, transform_indices = @transform_1, window_bounds = array<i64: 8, 16>}, {pipeline_mode = #tpu.pipeline_mode<synchronous>, transform_indices = @transform_2, window_bounds = array<i64: 8, 16>}, {pipeline_mode = #tpu.pipeline_mode<synchronous>, transform_indices = @transform_3, window_bounds = array<i64: 8, 1>}, {pipeline_mode = #tpu.pipeline_mode<synchronous>, transform_indices = @transform_4, window_bounds = array<i64: 8, 1>}, {pipeline_mode = #tpu.pipeline_mode<synchronous>, transform_indices = @transform_5, window_bounds = array<i64: 1, 1>}, {transform_indices = @transform_6, window_bounds = array<i64: 1, 128>}]} {
    %c0 = arith.constant 0 : index
    %c0_0 = arith.constant 0 : index
    %0 = vector.load %arg1[%c0, %c0_0] : memref<128x16xf32, #tpu.memory_space<vmem>>, vector<128x16xf32>
    %c0_1 = arith.constant 0 : index
    %c0_2 = arith.constant 0 : index
    %1 = vector.load %arg2[%c0_1, %c0_2] : memref<8x16xf32, #tpu.memory_space<vmem>>, vector<8x16xf32>
    %cst = arith.constant dense<0.000000e+00> : vector<8x128xf32>
    %2 = tpu.matmul %1, %0, %cst {dimension_numbers = #tpu.dot_dimension_numbers<[1], [1], [0], [0], [0, 0, 1, 0], [], []>, precision = #tpu.contract_precision<fp32>} : vector<8x16xf32>, vector<128x16xf32>, vector<8x128xf32> -> vector<8x128xf32>
    %c0_3 = arith.constant 0 : index
    %c0_4 = arith.constant 0 : index
    %3 = vector.load %arg3[%c0_3, %c0_4] : memref<8x16xf32, #tpu.memory_space<vmem>>, vector<8x16xf32>
    %4 = arith.mulf %0, %0 : vector<128x16xf32>
    %cst_5 = arith.constant dense<0.000000e+00> : vector<8x128xf32>
    %5 = tpu.matmul %3, %4, %cst_5 {dimension_numbers = #tpu.dot_dimension_numbers<[1], [1], [0], [0], [0, 0, 1, 0], [], []>, precision = #tpu.contract_precision<fp32>} : vector<8x16xf32>, vector<128x16xf32>, vector<8x128xf32> -> vector<8x128xf32>
    %6 = arith.addf %2, %5 : vector<8x128xf32>
    %c0_6 = arith.constant 0 : index
    %c0_7 = arith.constant 0 : index
    %7 = vector.load %arg4[%c0_6, %c0_7] : memref<8x1xf32, #tpu.memory_space<vmem>>, vector<8x1xf32>
    %8 = vector.broadcast %7 : vector<8x1xf32> to vector<8x128xf32>
    %9 = arith.addf %6, %8 : vector<8x128xf32>
    %cst_8 = arith.constant 0.000000e+00 : f32
    %10 = vector.broadcast %cst_8 : f32 to vector<8x128xf32>
    %11 = arith.minimumf %9, %10 : vector<8x128xf32>
    %12 = math.exp %11 : vector<8x128xf32>
    %c0_9 = arith.constant 0 : index
    %c0_10 = arith.constant 0 : index
    %13 = vector.load %arg5[%c0_9, %c0_10] : memref<8x1xf32, #tpu.memory_space<vmem>>, vector<8x1xf32>
    %14 = vector.broadcast %13 : vector<8x1xf32> to vector<8x128xf32>
    %15 = arith.mulf %12, %14 : vector<8x128xf32>
    %cst_11 = arith.constant dense<0.000000e+00> : vector<128xf32>
    %16 = vector.multi_reduction <add>, %15, %cst_11 [0] : vector<8x128xf32> to vector<128xf32>
    %17 = vector.shape_cast %16 : vector<128xf32> to vector<1x128xf32>
    %c0_12 = arith.constant 0 : index
    %c0_13 = arith.constant 0 : index
    %18 = vector.load %arg6[%c0_12, %c0_13] : memref<1x1xf32, #tpu.memory_space<vmem>>, vector<1x1xf32>
    %19 = vector.broadcast %18 : vector<1x1xf32> to vector<1x128xf32>
    %20 = arith.addf %17, %19 : vector<1x128xf32>
    %c0_14 = arith.constant 0 : index
    %c0_15 = arith.constant 0 : index
    %21 = vector.load %arg7[%c0_14, %c0_15] : memref<1x128xf32, #tpu.memory_space<vmem>>, vector<1x128xf32>
    tpu.vector_store %arg7[%c0_14, %c0_15], %20 {strides = array<i32>} : memref<1x128xf32, #tpu.memory_space<vmem>>, vector<1x128xf32>,
    return
  }
  func.func @transform_0(%arg0: i32) -> (i32, i32) {
    %c0_i32 = arith.constant 0 : i32
    %c0_i32_0 = arith.constant 0 : i32
    return %arg0, %c0_i32 : i32, i32
  }
  func.func @transform_1(%arg0: i32) -> (i32, i32) {
    %c0_i32 = arith.constant 0 : i32
    %c0_i32_0 = arith.constant 0 : i32
    %c0_i32_1 = arith.constant 0 : i32
    return %c0_i32, %c0_i32_0 : i32, i32
  }
  func.func @transform_2(%arg0: i32) -> (i32, i32) {
    %c0_i32 = arith.constant 0 : i32
    %c0_i32_0 = arith.constant 0 : i32
    %c0_i32_1 = arith.constant 0 : i32
    return %c0_i32, %c0_i32_0 : i32, i32
  }
  func.func @transform_3(%arg0: i32) -> (i32, i32) {
    %c0_i32 = arith.constant 0 : i32
    %c0_i32_0 = arith.constant 0 : i32
    %c0_i32_1 = arith.constant 0 : i32
    return %c0_i32, %c0_i32_0 : i32, i32
  }
  func.func @transform_4(%arg0: i32) -> (i32, i32) {
    %c0_i32 = arith.constant 0 : i32
    %c0_i32_0 = arith.constant 0 : i32
    %c0_i32_1 = arith.constant 0 : i32
    return %c0_i32, %c0_i32_0 : i32, i32
  }
  func.func @transform_5(%arg0: i32) -> (i32, i32) {
    %c0_i32 = arith.constant 0 : i32
    %c0_i32_0 = arith.constant 0 : i32
    %c0_i32_1 = arith.constant 0 : i32
    return %c0_i32, %c0_i32_0 : i32, i32
  }
  func.func @transform_6(%arg0: i32) -> (i32, i32) {
    %c0_i32 = arith.constant 0 : i32
    %c0_i32_0 = arith.constant 0 : i32
    return %c0_i32, %arg0 : i32, i32
  }
}

</mosaic_0001>

<llo_original>
// kernel: tpu_custom_call.1
$region0: #{tpu_custom_call.1}
  #allocation0 [shape = 'u32[]', space=smem, size = 0x4, offset = 0x4, fixed_abs, tag = 'smem constant byte address 0x4 - core index']
  #allocation1 [shape = 'u32[72,128]{1,0:T(1,128)}', space=vmem, size = 0x9000, scoped, tag = 'internal scratch']
  #allocation2 [shape = 'f32[1,1]{1,0:T(1,128)S(1)}', space=vmem, size = 0x200, scoped, tag = 'scoped memory for tpu_custom_call.1']
  %s0 = inlined_call_operand.vmem [shape: f32[1000,16], index: 0, kind: input, shape index: {}]
  %s1 = inlined_call_operand.vmem [shape: f32[8,16], index: 1, kind: input, shape index: {}]
  %s2 = inlined_call_operand.vmem [shape: f32[8,16], index: 2, kind: input, shape index: {}]
  %s3 = inlined_call_operand.vmem [shape: f32[8,1], index: 3, kind: input, shape index: {}]
  %s4 = inlined_call_operand.vmem [shape: f32[8,1], index: 4, kind: input, shape index: {}]
  %s5 = inlined_call_operand.<no memory space> [shape: f32[1,1], index: 5, kind: input, shape index: {}]
  %s6 = inlined_call_operand.hbm [shape: f32[1,1000], index: 6, kind: output, shape index: {}]
  %s7 = sld [smem:[#allocation0]]
  $region57: #{tpu_custom_call.1} parent=0
    _
  %s9 = ssub.s32 1, %s7
  %s10 = scalar_select 0, %s9, %s7
  %v11 = vstv %s5
  %12 = vst [vmem:[#allocation2] sm:$0x1] %v11
  $region1: #{tpu_custom_call.1} parent=0
    #allocation3 [shape = 'u8[1024]{0}', space=vmem, size = 0x400, scoped, tag = 'output window, operand 0']
    #allocation4 [shape = 's32[2]{0}', space=sflag, size = 0x8, scoped, tag = 'scoped memory for tpu_custom_call.1']
    %13 = vsyncpa [#allocation4], 0
    %s14 = scalar_lea.sflag [#allocation4], 1
    %15 = vsyncpa %s14, 0
    loop: start=0, step=1, limit=10
    $region2: #{tpu_custom_call.1} parent=1 // loop_pre_header
      _
    $region3: #{tpu_custom_call.1} parent=1 // loop_header
      %s17 = sphi 0, %s21
      %p18 = scmp.ge.s32.totalorder %s17, 10
      %s27 = sphi 0, %s29
      %s30 = sphi 0, %s27
      %s31 = sphi 0, %s30
      %s47 = sphi 0, %s31
      %s51 = sphi 0, %s51
      %s53 = sphi 0, %s51
      %s54 = sphi 0, %s53
      %s68 = sphi 0, %s54
      %s72 = sphi 0, %s72
      %s74 = sphi 0, %s72
      %s75 = sphi 0, %s74
      %s89 = sphi 0, %s75
      %s93 = sphi 0, %s93
      %s95 = sphi 0, %s93
      %s96 = sphi 0, %s95
      %s110 = sphi 0, %s96
      %s114 = sphi 0, %s114
      %s116 = sphi 0, %s114
      %s117 = sphi 0, %s116
      %s131 = sphi 0, %s117
      %s135 = sphi 0, %s135
      %s137 = sphi 0, %s135
      %s138 = sphi 0, %s137
      %s152 = sphi 0, %s138
      %s158 = sphi 0, %s160
      %s161 = sphi 0, %s158
      %s162 = sphi 0, %s161
      %s178 = sphi 0, %s162
    $region4: #{tpu_custom_call.1} parent=1 // loop_header_branch
      %20 = sbr.rel (%p18) target = $region8
    $region5: #{tpu_custom_call.1} parent=1 // loop_body
      %s22 = ssub.s32 %s17, 1
      %s23 = ssub.s32 %s17, 2
      %s24 = sadd.s32 %s17, 1
      %s25 = ssub.s32 %s17, %s24
      %p26 = scmp.eq.s32.totalorder %s25, 0
      %s28 = sadd.s32 %s27, 1
      %s29 = scalar_select %p26, %s27, %s28
      %p32 = pneg %p26
      %p33 = scmp.eq.s32.totalorder %s17, 7
      %p34 = por %p32, %p33
      %p35 = scmp.ne.s32.totalorder %s27, %s30
      %p36 = scmp.eq.s32.totalorder %s17, 0
      %p37 = por %p35, %p36
      %p38 = scmp.ne.s32.totalorder %s27, %s30
      %p39 = scmp.eq.s32.totalorder %s22, 7
      %p40 = por %p38, %p39
      %p41 = scmp.ne.s32.totalorder %s30, %s31
      %p42 = scmp.eq.s32.totalorder %s22, 0
      %p43 = por %p41, %p42
      %p44 = scmp.ne.s32.totalorder %s30, %s31
      %p45 = scmp.eq.s32.totalorder %s23, 7
      %p46 = por %p44, %p45
      %p48 = scmp.ne.s32.totalorder %s31, %s47
      %p49 = scmp.eq.s32.totalorder %s23, 0
      %p50 = por %p48, %p49
      %s52 = sadd.s32 %s51, 1
      %p55 = scmp.eq.s32.totalorder %s17, 7
      %p56 = scmp.ne.s32.totalorder %s51, %s53
      %p57 = scmp.eq.s32.totalorder %s17, 0
      %p58 = por %p56, %p57
      %p59 = scmp.ne.s32.totalorder %s51, %s53
      %p60 = scmp.eq.s32.totalorder %s22, 7
      %p61 = por %p59, %p60
      %p62 = scmp.ne.s32.totalorder %s53, %s54
      %p63 = scmp.eq.s32.totalorder %s22, 0
      %p64 = por %p62, %p63
      %p65 = scmp.ne.s32.totalorder %s53, %s54
      %p66 = scmp.eq.s32.totalorder %s23, 7
      %p67 = por %p65, %p66
      %p69 = scmp.ne.s32.totalorder %s54, %s68
      %p70 = scmp.eq.s32.totalorder %s23, 0
      %p71 = por %p69, %p70
      %s73 = sadd.s32 %s72, 1
      %p76 = scmp.eq.s32.totalorder %s17, 7
      %p77 = scmp.ne.s32.totalorder %s72, %s74
      %p78 = scmp.eq.s32.totalorder %s17, 0
      %p79 = por %p77, %p78
      %p80 = scmp.ne.s32.totalorder %s72, %s74
      %p81 = scmp.eq.s32.totalorder %s22, 7
      %p82 = por %p80, %p81
      %p83 = scmp.ne.s32.totalorder %s74, %s75
      %p84 = scmp.eq.s32.totalorder %s22, 0
      %p85 = por %p83, %p84
      %p86 = scmp.ne.s32.totalorder %s74, %s75
      %p87 = scmp.eq.s32.totalorder %s23, 7
      %p88 = por %p86, %p87
      %p90 = scmp.ne.s32.totalorder %s75, %s89
      %p91 = scmp.eq.s32.totalorder %s23, 0
      %p92 = por %p90, %p91
      %s94 = sadd.s32 %s93, 1
      %p97 = scmp.eq.s32.totalorder %s17, 7
      %p98 = scmp.ne.s32.totalorder %s93, %s95
      %p99 = scmp.eq.s32.totalorder %s17, 0
      %p100 = por %p98, %p99
      %p101 = scmp.ne.s32.totalorder %s93, %s95
      %p102 = scmp.eq.s32.totalorder %s22, 7
      %p103 = por %p101, %p102
      %p104 = scmp.ne.s32.totalorder %s95, %s96
      %p105 = scmp.eq.s32.totalorder %s22, 0
      %p106 = por %p104, %p105
      %p107 = scmp.ne.s32.totalorder %s95, %s96
      %p108 = scmp.eq.s32.totalorder %s23, 7
      %p109 = por %p107, %p108
      %p111 = scmp.ne.s32.totalorder %s96, %s110
      %p112 = scmp.eq.s32.totalorder %s23, 0
      %p113 = por %p111, %p112
      %s115 = sadd.s32 %s114, 1
      %p118 = scmp.eq.s32.totalorder %s17, 7
      %p119 = scmp.ne.s32.totalorder %s114, %s116
      %p120 = scmp.eq.s32.totalorder %s17, 0
      %p121 = por %p119, %p120
      %p122 = scmp.ne.s32.totalorder %s114, %s116
      %p123 = scmp.eq.s32.totalorder %s22, 7
      %p124 = por %p122, %p123
      %p125 = scmp.ne.s32.totalorder %s116, %s117
      %p126 = scmp.eq.s32.totalorder %s22, 0
      %p127 = por %p125, %p126
      %p128 = scmp.ne.s32.totalorder %s116, %s117
      %p129 = scmp.eq.s32.totalorder %s23, 7
      %p130 = por %p128, %p129
      %p132 = scmp.ne.s32.totalorder %s117, %s131
      %p133 = scmp.eq.s32.totalorder %s23, 0
      %p134 = por %p132, %p133
      %s136 = sadd.s32 %s135, 1
      %p139 = scmp.eq.s32.totalorder %s17, 7
      %p140 = scmp.ne.s32.totalorder %s135, %s137
      %p141 = scmp.eq.s32.totalorder %s17, 0
      %p142 = por %p140, %p141
      %p143 = scmp.ne.s32.totalorder %s135, %s137
      %p144 = scmp.eq.s32.totalorder %s22, 7
      %p145 = por %p143, %p144
      %p146 = scmp.ne.s32.totalorder %s137, %s138
      %p147 = scmp.eq.s32.totalorder %s22, 0
      %p148 = por %p146, %p147
      %p149 = scmp.ne.s32.totalorder %s137, %s138
      %p150 = scmp.eq.s32.totalorder %s23, 7
      %p151 = por %p149, %p150
      %p153 = scmp.ne.s32.totalorder %s138, %s152
      %p154 = scmp.eq.s32.totalorder %s23, 0
      %p155 = por %p153, %p154
      %s156 = ssub.s32 %s17, %s24
      %p157 = scmp.eq.s32.totalorder %s156, 0
      %s159 = sadd.s32 %s158, 1
      %s160 = scalar_select %p157, %s158, %s159
      %p163 = pneg %p157
      %p164 = scmp.eq.s32.totalorder %s17, 7
      %p165 = por %p163, %p164
      %p166 = scmp.ne.s32.totalorder %s158, %s161
      %p167 = scmp.eq.s32.totalorder %s17, 0
      %p168 = por %p166, %p167
      %p169 = scmp.ne.s32.totalorder %s158, %s161
      %p170 = scmp.eq.s32.totalorder %s22, 7
      %p171 = por %p169, %p170
      %p172 = scmp.ne.s32.totalorder %s161, %s162
      %p173 = scmp.eq.s32.totalorder %s22, 0
      %p174 = por %p172, %p173
      %p175 = scmp.ne.s32.totalorder %s161, %s162
      %p176 = scmp.eq.s32.totalorder %s23, 7
      %p177 = por %p175, %p176
      %p179 = scmp.ne.s32.totalorder %s162, %s178
      %p180 = scmp.eq.s32.totalorder %s23, 0
      %p181 = por %p179, %p180
      %p182 = scmp.le.s32.totalorder 1, %s17
      %p183 = scmp.lt.s32.totalorder %s17, 9
      %p184 = pnand %p182, %p183
      %p185 = pneg %p184
      // Predicated region
      $region9: #{tpu_custom_call.1} parent=5 // pred_check
        _
      $region10: #{tpu_custom_call.1} parent=5 // pred_check_branch
        %187 = sbr.rel (%p184) target = $region12
      $region11: #{tpu_custom_call.1} parent=5 // pred_region
        %s188 = ssub.s32 %s17, 1
        // Predicated region
        $region13: #{tpu_custom_call.1} parent=11 // pred_check
          %p189 = pneg %p64
        $region14: #{tpu_custom_call.1} parent=11 // pred_check_branch
          %191 = sbr.rel (%p189) target = $region16
        $region15: #{tpu_custom_call.1} parent=11 // pred_region
          _
        $region16: #{tpu_custom_call.1} parent=11 // pred_fallthru
          _
        // Predicated region
        $region17: #{tpu_custom_call.1} parent=11 // pred_check
          %p192 = pneg %p85
        $region18: #{tpu_custom_call.1} parent=11 // pred_check_branch
          %194 = sbr.rel (%p192) target = $region20
        $region19: #{tpu_custom_call.1} parent=11 // pred_region
          _
        $region20: #{tpu_custom_call.1} parent=11 // pred_fallthru
          _
        // Predicated region
        $region21: #{tpu_custom_call.1} parent=11 // pred_check
          %p195 = pneg %p106
        $region22: #{tpu_custom_call.1} parent=11 // pred_check_branch
          %197 = sbr.rel (%p195) target = $region24
        $region23: #{tpu_custom_call.1} parent=11 // pred_region
          _
        $region24: #{tpu_custom_call.1} parent=11 // pred_fallthru
          _
        // Predicated region
        $region25: #{tpu_custom_call.1} parent=11 // pred_check
          %p198 = pneg %p127
        $region26: #{tpu_custom_call.1} parent=11 // pred_check_branch
          %200 = sbr.rel (%p198) target = $region28
        $region27: #{tpu_custom_call.1} parent=11 // pred_region
          _
        $region28: #{tpu_custom_call.1} parent=11 // pred_fallthru
          _
        // Predicated region
        $region29: #{tpu_custom_call.1} parent=11 // pred_check
          %p201 = pneg %p148
        $region30: #{tpu_custom_call.1} parent=11 // pred_check_branch
          %203 = sbr.rel (%p201) target = $region32
        $region31: #{tpu_custom_call.1} parent=11 // pred_region
          _
        $region32: #{tpu_custom_call.1} parent=11 // pred_fallthru
          _
      $region12: #{tpu_custom_call.1} parent=5 // pred_fallthru
        _
      %p204 = scmp.lt.s32.totalorder %s17, 8
      // Predicated region
      $region33: #{tpu_custom_call.1} parent=5 // pred_check
        %p205 = pneg %p204
      $region34: #{tpu_custom_call.1} parent=5 // pred_check_branch
        %207 = sbr.rel (%p205) target = $region36
      $region35: #{tpu_custom_call.1} parent=5 // pred_region
        // Predicated region
        $region37: #{tpu_custom_call.1} parent=35 // pred_check
          %p208 = pneg %p37
        $region38: #{tpu_custom_call.1} parent=35 // pred_check_branch
          %210 = sbr.rel (%p208) target = $region40
        $region39: #{tpu_custom_call.1} parent=35 // pred_region
          %s211 = smul.u32 16, %s17
          %s212 = ssub.s32 125, %s211
          %p213 = scmp.lt.s32.totalorder %s212, 16
          %s214 = scalar_select %p213, %s212, 16
          %s215 = smul.u32 8, %s214
          %p216 = scmp.lt.s32.totalorder %s211, 124
          %s217 = scalar_select %p216, %s211, 124
          %s218 = smul.addr %s217, 8
          %s219 = scalar_lea.vmem %s0, %s218
          %s220 = smul.u32 16, %s17
          %s221 = ssub.s32 125, %s220
          %p222 = scmp.lt.s32.totalorder %s221, 16
          %s223 = scalar_select %p222, %s221, 16
          %s224 = smul.u32 8, %s223
        $region40: #{tpu_custom_call.1} parent=35 // pred_fallthru
          _
      $region36: #{tpu_custom_call.1} parent=5 // pred_fallthru
        _
      %p225 = scmp.le.s32.totalorder 1, %s17
      %p226 = scmp.lt.s32.totalorder %s17, 9
      %p227 = pnand %p225, %p226
      %p228 = pneg %p227
      // Predicated region
      $region41: #{tpu_custom_call.1} parent=5 // pred_check
        _
      $region42: #{tpu_custom_call.1} parent=5 // pred_check_branch
        %230 = sbr.rel (%p227) target = $region44
      $region43: #{tpu_custom_call.1} parent=5 // pred_region
        %s231 = ssub.s32 %s17, 1
        %s232 = smul.u32 16, %s22
        %s233 = ssub.s32 125, %s232
        %p234 = scmp.lt.s32.totalorder %s233, 16
        %s235 = scalar_select %p234, %s233, 16
        %s236 = smul.u32 8, %s235
        %p237 = scmp.lt.s32.totalorder %s232, 124
        %s238 = scalar_select %p237, %s232, 124
        %s239 = smul.addr %s238, 8
        %s240 = scalar_lea.vmem %s0, %s239
        %p241 = pneg %p43
        %p242 = pneg %p40
        %p243 = pneg %p64
        %p244 = pneg %p61
        %p245 = pneg %p85
        %p246 = pneg %p82
        %p247 = pneg %p106
        %p248 = pneg %p103
        %p249 = pneg %p127
        %p250 = pneg %p124
        %p251 = pneg %p148
        %p252 = pneg %p145
        %p253 = pneg %p174
        %p254 = pneg %p171
        %s255 = sand.u32 %s161, 1
        %s256 = scalar_lea.sflag [#allocation4], %s255
        %s257 = sand.u32 %s161, 1
        %s258 = scalar_lea.vmem [#allocation3], %s257
        %s259 = smul.u32 16, %s22
        %s260 = ssub.s32 125, %s259
        %p261 = scmp.lt.s32.totalorder %s260, 16
        %s262 = scalar_select %p261, %s260, 16
        %s263 = smul.u32 8, %s262
        %p264 = scmp.lt.s32.totalorder %s259, 124
        %s265 = scalar_select %p264, %s259, 124
        %s266 = smul.addr %s265, 8
        %s267 = scalar_lea.vmem %s0, %s266
        %s268 = smul.u32 16, %s22
        %s269 = ssub.s32 125, %s268
        %p270 = scmp.lt.s32.totalorder %s269, 16
        %s271 = scalar_select %p270, %s269, 16
        %s272 = smul.u32 8, %s271
        %v273 = vld [vmem:[%s267] sm:$0xff]
        %v274 = vld [vmem:[%s267 + $0x8] sm:$0xff]
        %v275 = vld [vmem:[%s267 + $0x10] sm:$0xff]
        %v276 = vld [vmem:[%s267 + $0x18] sm:$0xff]
        %v277 = vld [vmem:[%s267 + $0x20] sm:$0xff]
        %v278 = vld [vmem:[%s267 + $0x28] sm:$0xff]
        %v279 = vld [vmem:[%s267 + $0x30] sm:$0xff]
        %v280 = vld [vmem:[%s267 + $0x38] sm:$0xff]
        %v281 = vld [vmem:[%s267 + $0x40] sm:$0xff]
        %v282 = vld [vmem:[%s267 + $0x48] sm:$0xff]
        %v283 = vld [vmem:[%s267 + $0x50] sm:$0xff]
        %v284 = vld [vmem:[%s267 + $0x58] sm:$0xff]
        %v285 = vld [vmem:[%s267 + $0x60] sm:$0xff]
        %v286 = vld [vmem:[%s267 + $0x68] sm:$0xff]
        %v287 = vld [vmem:[%s267 + $0x70] sm:$0xff]
        %v288 = vld [vmem:[%s267 + $0x78] sm:$0xff]
        %v289 = vld [vmem:[%s1] sm:$0xff]
        %v290 = vld [vmem:[%s2] sm:$0xff]
        %v291 = vmul.f32 %v273, %v273
        %v292 = vmul.f32 %v274, %v274
        %v293 = vmul.f32 %v275, %v275
        %v294 = vmul.f32 %v276, %v276
        %v295 = vmul.f32 %v277, %v277
        %v296 = vmul.f32 %v278, %v278
        %v297 = vmul.f32 %v279, %v279
        %v298 = vmul.f32 %v280, %v280
        %v299 = vmul.f32 %v281, %v281
        %v300 = vmul.f32 %v282, %v282
        %v301 = vmul.f32 %v283, %v283
        %v302 = vmul.f32 %v284, %v284
        %v303 = vmul.f32 %v285, %v285
        %v304 = vmul.f32 %v286, %v286
        %v305 = vmul.f32 %v287, %v287
        %v306 = vmul.f32 %v288, %v288
        %vm307 = vcmask 130048
        %v309 = vsel %vm307, %v290, 0
        %v312 = vsel %vm307, %v291, 0
        %v315 = vsel %vm307, %v292, 0
        %v318 = vsel %vm307, %v293, 0
        %v321 = vsel %vm307, %v294, 0
        %v324 = vsel %vm307, %v295, 0
        %v327 = vsel %vm307, %v296, 0
        %v330 = vsel %vm307, %v297, 0
        %v333 = vsel %vm307, %v298, 0
        %v336 = vsel %vm307, %v299, 0
        %v339 = vsel %vm307, %v300, 0
        %v342 = vsel %vm307, %v301, 0
        %v345 = vsel %vm307, %v302, 0
        %v348 = vsel %vm307, %v303, 0
        %v351 = vsel %vm307, %v304, 0
        %v354 = vsel %vm307, %v305, 0
        %v357 = vsel %vm307, %v306, 0
        %v359 = vand.u32 %v357, 4294901760
        %360 = vmatpush.xpose.msra.mxu0 %v359
        %v361 = vand.u32 %v354, 4294901760
        %362 = vmatpush.xpose.msra.mxu0 %v361
        %v363 = vand.u32 %v351, 4294901760
        %364 = vmatpush.xpose.msra.mxu0 %v363
        %v365 = vand.u32 %v348, 4294901760
        %366 = vmatpush.xpose.msra.mxu0 %v365
        %v367 = vand.u32 %v345, 4294901760
        %368 = vmatpush.xpose.msra.mxu0 %v367
        %v369 = vand.u32 %v342, 4294901760
        %370 = vmatpush.xpose.msra.mxu0 %v369
        %v371 = vand.u32 %v339, 4294901760
        %372 = vmatpush.xpose.msra.mxu0 %v371
        %v373 = vand.u32 %v336, 4294901760
        %374 = vmatpush.xpose.msra.mxu0 %v373
        %v375 = vand.u32 %v333, 4294901760
        %376 = vmatpush.xpose.msra.mxu0 %v375
        %v377 = vand.u32 %v330, 4294901760
        %378 = vmatpush.xpose.msra.mxu0 %v377
        %v379 = vand.u32 %v327, 4294901760
        %380 = vmatpush.xpose.msra.mxu0 %v379
        %v381 = vand.u32 %v324, 4294901760
        %382 = vmatpush.xpose.msra.mxu0 %v381
        %v383 = vand.u32 %v321, 4294901760
        %384 = vmatpush.xpose.msra.mxu0 %v383
        %v385 = vand.u32 %v318, 4294901760
        %386 = vmatpush.xpose.msra.mxu0 %v385
        %v387 = vand.u32 %v315, 4294901760
        %388 = vmatpush.xpose.msra.mxu0 %v387
        %v389 = vand.u32 %v312, 4294901760
        %390 = vmatpush.xpose.msra.mxu0 %v389
        %v391 = vand.u32 %v309, 4294901760
        %v392 = vsub.f32 %v309, %v391
        %v393 = vand.u32 %v392, 4294901760
        %v394 = vsub.f32 %v392, %v393
        %v395 = vand.u32 %v394, 4294901760
        %396 = vmatmul.f32.gmra.mxu0 %v395
        %v397 = vpop.f32.mrf.mxu0
        %v398 = vadd.f32 0.0, %v397
        %399 = vdwg.mxu0
        %v400 = vand.u32 %v357, 4294901760
        %v401 = vsub.f32 %v357, %v400
        %v402 = vand.u32 %v401, 4294901760
        %v403 = vsub.f32 %v401, %v402
        %v404 = vand.u32 %v403, 4294901760
        %405 = vmatpush.xpose.msra.mxu0 %v404
        %v406 = vand.u32 %v354, 4294901760
        %v407 = vsub.f32 %v354, %v406
        %v408 = vand.u32 %v407, 4294901760
        %v409 = vsub.f32 %v407, %v408
        %v410 = vand.u32 %v409, 4294901760
        %411 = vmatpush.xpose.msra.mxu0 %v410
        %v412 = vand.u32 %v351, 4294901760
        %v413 = vsub.f32 %v351, %v412
        %v414 = vand.u32 %v413, 4294901760
        %v415 = vsub.f32 %v413, %v414
        %v416 = vand.u32 %v415, 4294901760
        %417 = vmatpush.xpose.msra.mxu0 %v416
        %v418 = vand.u32 %v348, 4294901760
        %v419 = vsub.f32 %v348, %v418
        %v420 = vand.u32 %v419, 4294901760
        %v421 = vsub.f32 %v419, %v420
        %v422 = vand.u32 %v421, 4294901760
        %423 = vmatpush.xpose.msra.mxu0 %v422
        %v424 = vand.u32 %v345, 4294901760
        %v425 = vsub.f32 %v345, %v424
        %v426 = vand.u32 %v425, 4294901760
        %v427 = vsub.f32 %v425, %v426
        %v428 = vand.u32 %v427, 4294901760
        %429 = vmatpush.xpose.msra.mxu0 %v428
        %v430 = vand.u32 %v342, 4294901760
        %v431 = vsub.f32 %v342, %v430
        %v432 = vand.u32 %v431, 4294901760
        %v433 = vsub.f32 %v431, %v432
        %v434 = vand.u32 %v433, 4294901760
        %435 = vmatpush.xpose.msra.mxu0 %v434
        %v436 = vand.u32 %v339, 4294901760
        %v437 = vsub.f32 %v339, %v436
        %v438 = vand.u32 %v437, 4294901760
        %v439 = vsub.f32 %v437, %v438
        %v440 = vand.u32 %v439, 4294901760
        %441 = vmatpush.xpose.msra.mxu0 %v440
        %v442 = vand.u32 %v336, 4294901760
        %v443 = vsub.f32 %v336, %v442
        %v444 = vand.u32 %v443, 4294901760
        %v445 = vsub.f32 %v443, %v444
        %v446 = vand.u32 %v445, 4294901760
        %447 = vmatpush.xpose.msra.mxu0 %v446
        %v448 = vand.u32 %v333, 4294901760
        %v449 = vsub.f32 %v333, %v448
        %v450 = vand.u32 %v449, 4294901760
        %v451 = vsub.f32 %v449, %v450
        %v452 = vand.u32 %v451, 4294901760
        %453 = vmatpush.xpose.msra.mxu0 %v452
        %v454 = vand.u32 %v330, 4294901760
        %v455 = vsub.f32 %v330, %v454
        %v456 = vand.u32 %v455, 4294901760
        %v457 = vsub.f32 %v455, %v456
        %v458 = vand.u32 %v457, 4294901760
        %459 = vmatpush.xpose.msra.mxu0 %v458
        %v460 = vand.u32 %v327, 4294901760
        %v461 = vsub.f32 %v327, %v460
        %v462 = vand.u32 %v461, 4294901760
        %v463 = vsub.f32 %v461, %v462
        %v464 = vand.u32 %v463, 4294901760
        %465 = vmatpush.xpose.msra.mxu0 %v464
        %v466 = vand.u32 %v324, 4294901760
        %v467 = vsub.f32 %v324, %v466
        %v468 = vand.u32 %v467, 4294901760
        %v469 = vsub.f32 %v467, %v468
        %v470 = vand.u32 %v469, 4294901760
        %471 = vmatpush.xpose.msra.mxu0 %v470
        %v472 = vand.u32 %v321, 4294901760
        %v473 = vsub.f32 %v321, %v472
        %v474 = vand.u32 %v473, 4294901760
        %v475 = vsub.f32 %v473, %v474
        %v476 = vand.u32 %v475, 4294901760
        %477 = vmatpush.xpose.msra.mxu0 %v476
        %v478 = vand.u32 %v318, 4294901760
        %v479 = vsub.f32 %v318, %v478
        %v480 = vand.u32 %v479, 4294901760
        %v481 = vsub.f32 %v479, %v480
        %v482 = vand.u32 %v481, 4294901760
        %483 = vmatpush.xpose.msra.mxu0 %v482
        %v484 = vand.u32 %v315, 4294901760
        %v485 = vsub.f32 %v315, %v484
        %v486 = vand.u32 %v485, 4294901760
        %v487 = vsub.f32 %v485, %v486
        %v488 = vand.u32 %v487, 4294901760
        %489 = vmatpush.xpose.msra.mxu0 %v488
        %v490 = vand.u32 %v312, 4294901760
        %v491 = vsub.f32 %v312, %v490
        %v492 = vand.u32 %v491, 4294901760
        %v493 = vsub.f32 %v491, %v492
        %v494 = vand.u32 %v493, 4294901760
        %495 = vmatpush.xpose.msra.mxu0 %v494
        %v496 = vand.u32 %v309, 4294901760
        %497 = vmatmul.f32.gmra.mxu0 %v496
        %v498 = vpop.f32.mrf.mxu0
        %v499 = vadd.f32 %v398, %v498
        %500 = vdwg.mxu0
        %v501 = vand.u32 %v357, 4294901760
        %v502 = vsub.f32 %v357, %v501
        %503 = vmatpush.xpose.msra.mxu0 %v502
        %v504 = vand.u32 %v354, 4294901760
        %v505 = vsub.f32 %v354, %v504
        %506 = vmatpush.xpose.msra.mxu0 %v505
        %v507 = vand.u32 %v351, 4294901760
        %v508 = vsub.f32 %v351, %v507
        %509 = vmatpush.xpose.msra.mxu0 %v508
        %v510 = vand.u32 %v348, 4294901760
        %v511 = vsub.f32 %v348, %v510
        %512 = vmatpush.xpose.msra.mxu0 %v511
        %v513 = vand.u32 %v345, 4294901760
        %v514 = vsub.f32 %v345, %v513
        %515 = vmatpush.xpose.msra.mxu0 %v514
        %v516 = vand.u32 %v342, 4294901760
        %v517 = vsub.f32 %v342, %v516
        %518 = vmatpush.xpose.msra.mxu0 %v517
        %v519 = vand.u32 %v339, 4294901760
        %v520 = vsub.f32 %v339, %v519
        %521 = vmatpush.xpose.msra.mxu0 %v520
        %v522 = vand.u32 %v336, 4294901760
        %v523 = vsub.f32 %v336, %v522
        %524 = vmatpush.xpose.msra.mxu0 %v523
        %v525 = vand.u32 %v333, 4294901760
        %v526 = vsub.f32 %v333, %v525
        %527 = vmatpush.xpose.msra.mxu0 %v526
        %v528 = vand.u32 %v330, 4294901760
        %v529 = vsub.f32 %v330, %v528
        %530 = vmatpush.xpose.msra.mxu0 %v529
        %v531 = vand.u32 %v327, 4294901760
        %v532 = vsub.f32 %v327, %v531
        %533 = vmatpush.xpose.msra.mxu0 %v532
        %v534 = vand.u32 %v324, 4294901760
        %v535 = vsub.f32 %v324, %v534
        %536 = vmatpush.xpose.msra.mxu0 %v535
        %v537 = vand.u32 %v321, 4294901760
        %v538 = vsub.f32 %v321, %v537
        %539 = vmatpush.xpose.msra.mxu0 %v538
        %v540 = vand.u32 %v318, 4294901760
        %v541 = vsub.f32 %v318, %v540
        %542 = vmatpush.xpose.msra.mxu0 %v541
        %v543 = vand.u32 %v315, 4294901760
        %v544 = vsub.f32 %v315, %v543
        %545 = vmatpush.xpose.msra.mxu0 %v544
        %v546 = vand.u32 %v312, 4294901760
        %v547 = vsub.f32 %v312, %v546
        %548 = vmatpush.xpose.msra.mxu0 %v547
        %v549 = vand.u32 %v309, 4294901760
        %v550 = vsub.f32 %v309, %v549
        %551 = vmatmul.f32.gmra.mxu0 %v550
        %v552 = vpop.f32.mrf.mxu0
        %v553 = vadd.f32 %v499, %v552
        %554 = vdwg.mxu0
        %v555 = vand.u32 %v357, 4294901760
        %556 = vmatpush.xpose.msra.mxu0 %v555
        %v557 = vand.u32 %v354, 4294901760
        %558 = vmatpush.xpose.msra.mxu0 %v557
        %v559 = vand.u32 %v351, 4294901760
        %560 = vmatpush.xpose.msra.mxu0 %v559
        %v561 = vand.u32 %v348, 4294901760
        %562 = vmatpush.xpose.msra.mxu0 %v561
        %v563 = vand.u32 %v345, 4294901760
        %564 = vmatpush.xpose.msra.mxu0 %v563
        %v565 = vand.u32 %v342, 4294901760
        %566 = vmatpush.xpose.msra.mxu0 %v565
        %v567 = vand.u32 %v339, 4294901760
        %568 = vmatpush.xpose.msra.mxu0 %v567
        %v569 = vand.u32 %v336, 4294901760
        %570 = vmatpush.xpose.msra.mxu0 %v569
        %v571 = vand.u32 %v333, 4294901760
        %572 = vmatpush.xpose.msra.mxu0 %v571
        %v573 = vand.u32 %v330, 4294901760
        %574 = vmatpush.xpose.msra.mxu0 %v573
        %v575 = vand.u32 %v327, 4294901760
        %576 = vmatpush.xpose.msra.mxu0 %v575
        %v577 = vand.u32 %v324, 4294901760
        %578 = vmatpush.xpose.msra.mxu0 %v577
        %v579 = vand.u32 %v321, 4294901760
        %580 = vmatpush.xpose.msra.mxu0 %v579
        %v581 = vand.u32 %v318, 4294901760
        %582 = vmatpush.xpose.msra.mxu0 %v581
        %v583 = vand.u32 %v315, 4294901760
        %584 = vmatpush.xpose.msra.mxu0 %v583
        %v585 = vand.u32 %v312, 4294901760
        %586 = vmatpush.xpose.msra.mxu0 %v585
        %v587 = vand.u32 %v309, 4294901760
        %v588 = vsub.f32 %v309, %v587
        %v589 = vand.u32 %v588, 4294901760
        %590 = vmatmul.f32.gmra.mxu0 %v589
        %v591 = vpop.f32.mrf.mxu0
        %v592 = vadd.f32 %v553, %v591
        %593 = vdwg.mxu0
        %v594 = vand.u32 %v357, 4294901760
        %v595 = vsub.f32 %v357, %v594
        %v596 = vand.u32 %v595, 4294901760
        %597 = vmatpush.xpose.msra.mxu0 %v596
        %v598 = vand.u32 %v354, 4294901760
        %v599 = vsub.f32 %v354, %v598
        %v600 = vand.u32 %v599, 4294901760
        %601 = vmatpush.xpose.msra.mxu0 %v600
        %v602 = vand.u32 %v351, 4294901760
        %v603 = vsub.f32 %v351, %v602
        %v604 = vand.u32 %v603, 4294901760
        %605 = vmatpush.xpose.msra.mxu0 %v604
        %v606 = vand.u32 %v348, 4294901760
        %v607 = vsub.f32 %v348, %v606
        %v608 = vand.u32 %v607, 4294901760
        %609 = vmatpush.xpose.msra.mxu0 %v608
        %v610 = vand.u32 %v345, 4294901760
        %v611 = vsub.f32 %v345, %v610
        %v612 = vand.u32 %v611, 4294901760
        %613 = vmatpush.xpose.msra.mxu0 %v612
        %v614 = vand.u32 %v342, 4294901760
        %v615 = vsub.f32 %v342, %v614
        %v616 = vand.u32 %v615, 4294901760
        %617 = vmatpush.xpose.msra.mxu0 %v616
        %v618 = vand.u32 %v339, 4294901760
        %v619 = vsub.f32 %v339, %v618
        %v620 = vand.u32 %v619, 4294901760
        %621 = vmatpush.xpose.msra.mxu0 %v620
        %v622 = vand.u32 %v336, 4294901760
        %v623 = vsub.f32 %v336, %v622
        %v624 = vand.u32 %v623, 4294901760
        %625 = vmatpush.xpose.msra.mxu0 %v624
        %v626 = vand.u32 %v333, 4294901760
        %v627 = vsub.f32 %v333, %v626
        %v628 = vand.u32 %v627, 4294901760
        %629 = vmatpush.xpose.msra.mxu0 %v628
        %v630 = vand.u32 %v330, 4294901760
        %v631 = vsub.f32 %v330, %v630
        %v632 = vand.u32 %v631, 4294901760
        %633 = vmatpush.xpose.msra.mxu0 %v632
        %v634 = vand.u32 %v327, 4294901760
        %v635 = vsub.f32 %v327, %v634
        %v636 = vand.u32 %v635, 4294901760
        %637 = vmatpush.xpose.msra.mxu0 %v636
        %v638 = vand.u32 %v324, 4294901760
        %v639 = vsub.f32 %v324, %v638
        %v640 = vand.u32 %v639, 4294901760
        %641 = vmatpush.xpose.msra.mxu0 %v640
        %v642 = vand.u32 %v321, 4294901760
        %v643 = vsub.f32 %v321, %v642
        %v644 = vand.u32 %v643, 4294901760
        %645 = vmatpush.xpose.msra.mxu0 %v644
        %v646 = vand.u32 %v318, 4294901760
        %v647 = vsub.f32 %v318, %v646
        %v648 = vand.u32 %v647, 4294901760
        %649 = vmatpush.xpose.msra.mxu0 %v648
        %v650 = vand.u32 %v315, 4294901760
        %v651 = vsub.f32 %v315, %v650
        %v652 = vand.u32 %v651, 4294901760
        %653 = vmatpush.xpose.msra.mxu0 %v652
        %v654 = vand.u32 %v312, 4294901760
        %v655 = vsub.f32 %v312, %v654
        %v656 = vand.u32 %v655, 4294901760
        %657 = vmatpush.xpose.msra.mxu0 %v656
        %v658 = vand.u32 %v309, 4294901760
        %659 = vmatmul.f32.gmra.mxu0 %v658
        %v660 = vpop.f32.mrf.mxu0
        %v661 = vadd.f32 %v592, %v660
        %662 = vdwg.mxu0
        %v663 = vand.u32 %v357, 4294901760
        %664 = vmatpush.xpose.msra.mxu0 %v663
        %v665 = vand.u32 %v354, 4294901760
        %666 = vmatpush.xpose.msra.mxu0 %v665
        %v667 = vand.u32 %v351, 4294901760
        %668 = vmatpush.xpose.msra.mxu0 %v667
        %v669 = vand.u32 %v348, 4294901760
        %670 = vmatpush.xpose.msra.mxu0 %v669
        %v671 = vand.u32 %v345, 4294901760
        %672 = vmatpush.xpose.msra.mxu0 %v671
        %v673 = vand.u32 %v342, 4294901760
        %674 = vmatpush.xpose.msra.mxu0 %v673
        %v675 = vand.u32 %v339, 4294901760
        %676 = vmatpush.xpose.msra.mxu0 %v675
        %v677 = vand.u32 %v336, 4294901760
        %678 = vmatpush.xpose.msra.mxu0 %v677
        %v679 = vand.u32 %v333, 4294901760
        %680 = vmatpush.xpose.msra.mxu0 %v679
        %v681 = vand.u32 %v330, 4294901760
        %682 = vmatpush.xpose.msra.mxu0 %v681
        %v683 = vand.u32 %v327, 4294901760
        %684 = vmatpush.xpose.msra.mxu0 %v683
        %v685 = vand.u32 %v324, 4294901760
        %686 = vmatpush.xpose.msra.mxu0 %v685
        %v687 = vand.u32 %v321, 4294901760
        %688 = vmatpush.xpose.msra.mxu0 %v687
        %v689 = vand.u32 %v318, 4294901760
        %690 = vmatpush.xpose.msra.mxu0 %v689
        %v691 = vand.u32 %v315, 4294901760
        %692 = vmatpush.xpose.msra.mxu0 %v691
        %v693 = vand.u32 %v312, 4294901760
        %694 = vmatpush.xpose.msra.mxu0 %v693
        %v695 = vand.u32 %v309, 4294901760
        %696 = vmatmul.f32.gmra.mxu0 %v695
        %v697 = vpop.f32.mrf.mxu0
        %v698 = vadd.f32 %v661, %v697
        %699 = vdwg.mxu0
        %v701 = vsel %vm307, %v289, 0
        %v704 = vsel %vm307, %v273, 0
        %v707 = vsel %vm307, %v274, 0
        %v710 = vsel %vm307, %v275, 0
        %v713 = vsel %vm307, %v276, 0
        %v716 = vsel %vm307, %v277, 0
        %v719 = vsel %vm307, %v278, 0
        %v722 = vsel %vm307, %v279, 0
        %v725 = vsel %vm307, %v280, 0
        %v728 = vsel %vm307, %v281, 0
        %v731 = vsel %vm307, %v282, 0
        %v734 = vsel %vm307, %v283, 0
        %v737 = vsel %vm307, %v284, 0
        %v740 = vsel %vm307, %v285, 0
        %v743 = vsel %vm307, %v286, 0
        %v746 = vsel %vm307, %v287, 0
        %v749 = vsel %vm307, %v288, 0
        %v751 = vand.u32 %v749, 4294901760
        %752 = vmatpush.xpose.msra.mxu0 %v751
        %v753 = vand.u32 %v746, 4294901760
        %754 = vmatpush.xpose.msra.mxu0 %v753
        %v755 = vand.u32 %v743, 4294901760
        %756 = vmatpush.xpose.msra.mxu0 %v755
        %v757 = vand.u32 %v740, 4294901760
        %758 = vmatpush.xpose.msra.mxu0 %v757
        %v759 = vand.u32 %v737, 4294901760
        %760 = vmatpush.xpose.msra.mxu0 %v759
        %v761 = vand.u32 %v734, 4294901760
        %762 = vmatpush.xpose.msra.mxu0 %v761
        %v763 = vand.u32 %v731, 4294901760
        %764 = vmatpush.xpose.msra.mxu0 %v763
        %v765 = vand.u32 %v728, 4294901760
        %766 = vmatpush.xpose.msra.mxu0 %v765
        %v767 = vand.u32 %v725, 4294901760
        %768 = vmatpush.xpose.msra.mxu0 %v767
        %v769 = vand.u32 %v722, 4294901760
        %770 = vmatpush.xpose.msra.mxu0 %v769
        %v771 = vand.u32 %v719, 4294901760
        %772 = vmatpush.xpose.msra.mxu0 %v771
        %v773 = vand.u32 %v716, 4294901760
        %774 = vmatpush.xpose.msra.mxu0 %v773
        %v775 = vand.u32 %v713, 4294901760
        %776 = vmatpush.xpose.msra.mxu0 %v775
        %v777 = vand.u32 %v710, 4294901760
        %778 = vmatpush.xpose.msra.mxu0 %v777
        %v779 = vand.u32 %v707, 4294901760
        %780 = vmatpush.xpose.msra.mxu0 %v779
        %v781 = vand.u32 %v704, 4294901760
        %782 = vmatpush.xpose.msra.mxu0 %v781
        %v783 = vand.u32 %v701, 4294901760
        %v784 = vsub.f32 %v701, %v783
        %v785 = vand.u32 %v784, 4294901760
        %v786 = vsub.f32 %v784, %v785
        %v787 = vand.u32 %v786, 4294901760
        %788 = vmatmul.f32.gmra.mxu0 %v787
        %v789 = vpop.f32.mrf.mxu0
        %v790 = vadd.f32 %v698, %v789
        %791 = vdwg.mxu0
        %v792 = vand.u32 %v749, 4294901760
        %v793 = vsub.f32 %v749, %v792
        %v794 = vand.u32 %v793, 4294901760
        %v795 = vsub.f32 %v793, %v794
        %v796 = vand.u32 %v795, 4294901760
        %797 = vmatpush.xpose.msra.mxu0 %v796
        %v798 = vand.u32 %v746, 4294901760
        %v799 = vsub.f32 %v746, %v798
        %v800 = vand.u32 %v799, 4294901760
        %v801 = vsub.f32 %v799, %v800
        %v802 = vand.u32 %v801, 4294901760
        %803 = vmatpush.xpose.msra.mxu0 %v802
        %v804 = vand.u32 %v743, 4294901760
        %v805 = vsub.f32 %v743, %v804
        %v806 = vand.u32 %v805, 4294901760
        %v807 = vsub.f32 %v805, %v806
        %v808 = vand.u32 %v807, 4294901760
        %809 = vmatpush.xpose.msra.mxu0 %v808
        %v810 = vand.u32 %v740, 4294901760
        %v811 = vsub.f32 %v740, %v810
        %v812 = vand.u32 %v811, 4294901760
        %v813 = vsub.f32 %v811, %v812
        %v814 = vand.u32 %v813, 4294901760
        %815 = vmatpush.xpose.msra.mxu0 %v814
        %v816 = vand.u32 %v737, 4294901760
        %v817 = vsub.f32 %v737, %v816
        %v818 = vand.u32 %v817, 4294901760
        %v819 = vsub.f32 %v817, %v818
        %v820 = vand.u32 %v819, 4294901760
        %821 = vmatpush.xpose.msra.mxu0 %v820
        %v822 = vand.u32 %v734, 4294901760
        %v823 = vsub.f32 %v734, %v822
        %v824 = vand.u32 %v823, 4294901760
        %v825 = vsub.f32 %v823, %v824
        %v826 = vand.u32 %v825, 4294901760
        %827 = vmatpush.xpose.msra.mxu0 %v826
        %v828 = vand.u32 %v731, 4294901760
        %v829 = vsub.f32 %v731, %v828
        %v830 = vand.u32 %v829, 4294901760
        %v831 = vsub.f32 %v829, %v830
        %v832 = vand.u32 %v831, 4294901760
        %833 = vmatpush.xpose.msra.mxu0 %v832
        %v834 = vand.u32 %v728, 4294901760
        %v835 = vsub.f32 %v728, %v834
        %v836 = vand.u32 %v835, 4294901760
        %v837 = vsub.f32 %v835, %v836
        %v838 = vand.u32 %v837, 4294901760
        %839 = vmatpush.xpose.msra.mxu0 %v838
        %v840 = vand.u32 %v725, 4294901760
        %v841 = vsub.f32 %v725, %v840
        %v842 = vand.u32 %v841, 4294901760
        %v843 = vsub.f32 %v841, %v842
        %v844 = vand.u32 %v843, 4294901760
        %845 = vmatpush.xpose.msra.mxu0 %v844
        %v846 = vand.u32 %v722, 4294901760
        %v847 = vsub.f32 %v722, %v846
        %v848 = vand.u32 %v847, 4294901760
        %v849 = vsub.f32 %v847, %v848
        %v850 = vand.u32 %v849, 4294901760
        %851 = vmatpush.xpose.msra.mxu0 %v850
        %v852 = vand.u32 %v719, 4294901760
        %v853 = vsub.f32 %v719, %v852
        %v854 = vand.u32 %v853, 4294901760
        %v855 = vsub.f32 %v853, %v854
        %v856 = vand.u32 %v855, 4294901760
        %857 = vmatpush.xpose.msra.mxu0 %v856
        %v858 = vand.u32 %v716, 4294901760
        %v859 = vsub.f32 %v716, %v858
        %v860 = vand.u32 %v859, 4294901760
        %v861 = vsub.f32 %v859, %v860
        %v862 = vand.u32 %v861, 4294901760
        %863 = vmatpush.xpose.msra.mxu0 %v862
        %v864 = vand.u32 %v713, 4294901760
        %v865 = vsub.f32 %v713, %v864
        %v866 = vand.u32 %v865, 4294901760
        %v867 = vsub.f32 %v865, %v866
        %v868 = vand.u32 %v867, 4294901760
        %869 = vmatpush.xpose.msra.mxu0 %v868
        %v870 = vand.u32 %v710, 4294901760
        %v871 = vsub.f32 %v710, %v870
        %v872 = vand.u32 %v871, 4294901760
        %v873 = vsub.f32 %v871, %v872
        %v874 = vand.u32 %v873, 4294901760
        %875 = vmatpush.xpose.msra.mxu0 %v874
        %v876 = vand.u32 %v707, 4294901760
        %v877 = vsub.f32 %v707, %v876
        %v878 = vand.u32 %v877, 4294901760
        %v879 = vsub.f32 %v877, %v878
        %v880 = vand.u32 %v879, 4294901760
        %881 = vmatpush.xpose.msra.mxu0 %v880
        %v882 = vand.u32 %v704, 4294901760
        %v883 = vsub.f32 %v704, %v882
        %v884 = vand.u32 %v883, 4294901760
        %v885 = vsub.f32 %v883, %v884
        %v886 = vand.u32 %v885, 4294901760
        %887 = vmatpush.xpose.msra.mxu0 %v886
        %v888 = vand.u32 %v701, 4294901760
        %889 = vmatmul.f32.gmra.mxu0 %v888
        %v890 = vpop.f32.mrf.mxu0
        %v891 = vadd.f32 %v790, %v890
        %892 = vdwg.mxu0
        %v893 = vand.u32 %v749, 4294901760
        %v894 = vsub.f32 %v749, %v893
        %895 = vmatpush.xpose.msra.mxu0 %v894
        %v896 = vand.u32 %v746, 4294901760
        %v897 = vsub.f32 %v746, %v896
        %898 = vmatpush.xpose.msra.mxu0 %v897
        %v899 = vand.u32 %v743, 4294901760
        %v900 = vsub.f32 %v743, %v899
        %901 = vmatpush.xpose.msra.mxu0 %v900
        %v902 = vand.u32 %v740, 4294901760
        %v903 = vsub.f32 %v740, %v902
        %904 = vmatpush.xpose.msra.mxu0 %v903
        %v905 = vand.u32 %v737, 4294901760
        %v906 = vsub.f32 %v737, %v905
        %907 = vmatpush.xpose.msra.mxu0 %v906
        %v908 = vand.u32 %v734, 4294901760
        %v909 = vsub.f32 %v734, %v908
        %910 = vmatpush.xpose.msra.mxu0 %v909
        %v911 = vand.u32 %v731, 4294901760
        %v912 = vsub.f32 %v731, %v911
        %913 = vmatpush.xpose.msra.mxu0 %v912
        %v914 = vand.u32 %v728, 4294901760
        %v915 = vsub.f32 %v728, %v914
        %916 = vmatpush.xpose.msra.mxu0 %v915
        %v917 = vand.u32 %v725, 4294901760
        %v918 = vsub.f32 %v725, %v917
        %919 = vmatpush.xpose.msra.mxu0 %v918
        %v920 = vand.u32 %v722, 4294901760
        %v921 = vsub.f32 %v722, %v920
        %922 = vmatpush.xpose.msra.mxu0 %v921
        %v923 = vand.u32 %v719, 4294901760
        %v924 = vsub.f32 %v719, %v923
        %925 = vmatpush.xpose.msra.mxu0 %v924
        %v926 = vand.u32 %v716, 4294901760
        %v927 = vsub.f32 %v716, %v926
        %928 = vmatpush.xpose.msra.mxu0 %v927
        %v929 = vand.u32 %v713, 4294901760
        %v930 = vsub.f32 %v713, %v929
        %931 = vmatpush.xpose.msra.mxu0 %v930
        %v932 = vand.u32 %v710, 4294901760
        %v933 = vsub.f32 %v710, %v932
        %934 = vmatpush.xpose.msra.mxu0 %v933
        %v935 = vand.u32 %v707, 4294901760
        %v936 = vsub.f32 %v707, %v935
        %937 = vmatpush.xpose.msra.mxu0 %v936
        %v938 = vand.u32 %v704, 4294901760
        %v939 = vsub.f32 %v704, %v938
        %940 = vmatpush.xpose.msra.mxu0 %v939
        %v941 = vand.u32 %v701, 4294901760
        %v942 = vsub.f32 %v701, %v941
        %943 = vmatmul.f32.gmra.mxu0 %v942
        %v944 = vpop.f32.mrf.mxu0
        %v945 = vadd.f32 %v891, %v944
        %946 = vdwg.mxu0
        %v947 = vand.u32 %v749, 4294901760
        %948 = vmatpush.xpose.msra.mxu0 %v947
        %v949 = vand.u32 %v746, 4294901760
        %950 = vmatpush.xpose.msra.mxu0 %v949
        %v951 = vand.u32 %v743, 4294901760
        %952 = vmatpush.xpose.msra.mxu0 %v951
        %v953 = vand.u32 %v740, 4294901760
        %954 = vmatpush.xpose.msra.mxu0 %v953
        %v955 = vand.u32 %v737, 4294901760
        %956 = vmatpush.xpose.msra.mxu0 %v955
        %v957 = vand.u32 %v734, 4294901760
        %958 = vmatpush.xpose.msra.mxu0 %v957
        %v959 = vand.u32 %v731, 4294901760
        %960 = vmatpush.xpose.msra.mxu0 %v959
        %v961 = vand.u32 %v728, 4294901760
        %962 = vmatpush.xpose.msra.mxu0 %v961
        %v963 = vand.u32 %v725, 4294901760
        %964 = vmatpush.xpose.msra.mxu0 %v963
        %v965 = vand.u32 %v722, 4294901760
        %966 = vmatpush.xpose.msra.mxu0 %v965
        %v967 = vand.u32 %v719, 4294901760
        %968 = vmatpush.xpose.msra.mxu0 %v967
        %v969 = vand.u32 %v716, 4294901760
        %970 = vmatpush.xpose.msra.mxu0 %v969
        %v971 = vand.u32 %v713, 4294901760
        %972 = vmatpush.xpose.msra.mxu0 %v971
        %v973 = vand.u32 %v710, 4294901760
        %974 = vmatpush.xpose.msra.mxu0 %v973
        %v975 = vand.u32 %v707, 4294901760
        %976 = vmatpush.xpose.msra.mxu0 %v975
        %v977 = vand.u32 %v704, 4294901760
        %978 = vmatpush.xpose.msra.mxu0 %v977
        %v979 = vand.u32 %v701, 4294901760
        %v980 = vsub.f32 %v701, %v979
        %v981 = vand.u32 %v980, 4294901760
        %982 = vmatmul.f32.gmra.mxu0 %v981
        %v983 = vpop.f32.mrf.mxu0
        %v984 = vadd.f32 %v945, %v983
        %985 = vdwg.mxu0
        %v986 = vand.u32 %v749, 4294901760
        %v987 = vsub.f32 %v749, %v986
        %v988 = vand.u32 %v987, 4294901760
        %989 = vmatpush.xpose.msra.mxu0 %v988
        %v990 = vand.u32 %v746, 4294901760
        %v991 = vsub.f32 %v746, %v990
        %v992 = vand.u32 %v991, 4294901760
        %993 = vmatpush.xpose.msra.mxu0 %v992
        %v994 = vand.u32 %v743, 4294901760
        %v995 = vsub.f32 %v743, %v994
        %v996 = vand.u32 %v995, 4294901760
        %997 = vmatpush.xpose.msra.mxu0 %v996
        %v998 = vand.u32 %v740, 4294901760
        %v999 = vsub.f32 %v740, %v998
        %v1000 = vand.u32 %v999, 4294901760
        %1001 = vmatpush.xpose.msra.mxu0 %v1000
        %v1002 = vand.u32 %v737, 4294901760
        %v1003 = vsub.f32 %v737, %v1002
        %v1004 = vand.u32 %v1003, 4294901760
        %1005 = vmatpush.xpose.msra.mxu0 %v1004
        %v1006 = vand.u32 %v734, 4294901760
        %v1007 = vsub.f32 %v734, %v1006
        %v1008 = vand.u32 %v1007, 4294901760
        %1009 = vmatpush.xpose.msra.mxu0 %v1008
        %v1010 = vand.u32 %v731, 4294901760
        %v1011 = vsub.f32 %v731, %v1010
        %v1012 = vand.u32 %v1011, 4294901760
        %1013 = vmatpush.xpose.msra.mxu0 %v1012
        %v1014 = vand.u32 %v728, 4294901760
        %v1015 = vsub.f32 %v728, %v1014
        %v1016 = vand.u32 %v1015, 4294901760
        %1017 = vmatpush.xpose.msra.mxu0 %v1016
        %v1018 = vand.u32 %v725, 4294901760
        %v1019 = vsub.f32 %v725, %v1018
        %v1020 = vand.u32 %v1019, 4294901760
        %1021 = vmatpush.xpose.msra.mxu0 %v1020
        %v1022 = vand.u32 %v722, 4294901760
        %v1023 = vsub.f32 %v722, %v1022
        %v1024 = vand.u32 %v1023, 4294901760
        %1025 = vmatpush.xpose.msra.mxu0 %v1024
        %v1026 = vand.u32 %v719, 4294901760
        %v1027 = vsub.f32 %v719, %v1026
        %v1028 = vand.u32 %v1027, 4294901760
        %1029 = vmatpush.xpose.msra.mxu0 %v1028
        %v1030 = vand.u32 %v716, 4294901760
        %v1031 = vsub.f32 %v716, %v1030
        %v1032 = vand.u32 %v1031, 4294901760
        %1033 = vmatpush.xpose.msra.mxu0 %v1032
        %v1034 = vand.u32 %v713, 4294901760
        %v1035 = vsub.f32 %v713, %v1034
        %v1036 = vand.u32 %v1035, 4294901760
        %1037 = vmatpush.xpose.msra.mxu0 %v1036
        %v1038 = vand.u32 %v710, 4294901760
        %v1039 = vsub.f32 %v710, %v1038
        %v1040 = vand.u32 %v1039, 4294901760
        %1041 = vmatpush.xpose.msra.mxu0 %v1040
        %v1042 = vand.u32 %v707, 4294901760
        %v1043 = vsub.f32 %v707, %v1042
        %v1044 = vand.u32 %v1043, 4294901760
        %1045 = vmatpush.xpose.msra.mxu0 %v1044
        %v1046 = vand.u32 %v704, 4294901760
        %v1047 = vsub.f32 %v704, %v1046
        %v1048 = vand.u32 %v1047, 4294901760
        %1049 = vmatpush.xpose.msra.mxu0 %v1048
        %v1050 = vand.u32 %v701, 4294901760
        %1051 = vmatmul.f32.gmra.mxu0 %v1050
        %v1052 = vpop.f32.mrf.mxu0
        %v1053 = vadd.f32 %v984, %v1052
        %1054 = vdwg.mxu0
        %v1055 = vand.u32 %v749, 4294901760
        %1056 = vmatpush.xpose.msra.mxu0 %v1055
        %v1057 = vand.u32 %v746, 4294901760
        %1058 = vmatpush.xpose.msra.mxu0 %v1057
        %v1059 = vand.u32 %v743, 4294901760
        %1060 = vmatpush.xpose.msra.mxu0 %v1059
        %v1061 = vand.u32 %v740, 4294901760
        %1062 = vmatpush.xpose.msra.mxu0 %v1061
        %v1063 = vand.u32 %v737, 4294901760
        %1064 = vmatpush.xpose.msra.mxu0 %v1063
        %v1065 = vand.u32 %v734, 4294901760
        %1066 = vmatpush.xpose.msra.mxu0 %v1065
        %v1067 = vand.u32 %v731, 4294901760
        %1068 = vmatpush.xpose.msra.mxu0 %v1067
        %v1069 = vand.u32 %v728, 4294901760
        %1070 = vmatpush.xpose.msra.mxu0 %v1069
        %v1071 = vand.u32 %v725, 4294901760
        %1072 = vmatpush.xpose.msra.mxu0 %v1071
        %v1073 = vand.u32 %v722, 4294901760
        %1074 = vmatpush.xpose.msra.mxu0 %v1073
        %v1075 = vand.u32 %v719, 4294901760
        %1076 = vmatpush.xpose.msra.mxu0 %v1075
        %v1077 = vand.u32 %v716, 4294901760
        %1078 = vmatpush.xpose.msra.mxu0 %v1077
        %v1079 = vand.u32 %v713, 4294901760
        %1080 = vmatpush.xpose.msra.mxu0 %v1079
        %v1081 = vand.u32 %v710, 4294901760
        %1082 = vmatpush.xpose.msra.mxu0 %v1081
        %v1083 = vand.u32 %v707, 4294901760
        %1084 = vmatpush.xpose.msra.mxu0 %v1083
        %v1085 = vand.u32 %v704, 4294901760
        %1086 = vmatpush.xpose.msra.mxu0 %v1085
        %v1087 = vand.u32 %v701, 4294901760
        %1088 = vmatmul.f32.gmra.mxu0 %v1087
        %v1089 = vpop.f32.mrf.mxu0
        %v1090 = vadd.f32 %v1053, %v1089
        %1091 = vdwg.mxu0
        %v1092 = vld [vmem:[%s3] sm:$0xff]
        %1094 = vset.pattern.permute.xlu0 0
        %1095 = vperm.xlu0 %1094, %v1092
        %v1096 = vpop.permute.xlu0 %1095
        %v1098 = vadd.f32 %v1090, %v1096
        %v1099 = vmin.f32 %v1098, 0.0
        %v1100 = vmul.f32 %v1099, 1.442695
        %v1101 = vpow.pop %v1100
        %v1102 = vld [vmem:[%s4] sm:$0xff]
        %1104 = vset.pattern.permute.xlu0 0
        %1105 = vperm.xlu0 %1104, %v1102
        %v1106 = vpop.permute.xlu0 %1105
        %v1108 = vmul.f32 %v1101, %v1106
        %v1109 = vrot.slane %v1108, 4
        %v1110 = vadd.f32 %v1108, %v1109
        %v1111 = vrot.slane %v1110, 2
        %v1112 = vadd.f32 %v1110, %v1111
        %v1113 = vrot.slane %v1112, 1
        %v1114 = vadd.f32 %v1112, %v1113
        %v1115 = vld [vmem:[#allocation2] sm:$0x1]
        %1117 = vset.pattern.permute.xlu0 0
        %1118 = vperm.xlu0 %1117, %v1115
        %v1119 = vpop.permute.xlu0 %1118
        %v1121 = vperm.slane %v1119, 0
        %v1122 = vadd.f32 %v1114, %v1121
        %1123 = vst [vmem:[%s258] sm:$0x1] %v1122
        %s1124 = sand.u32 %s161, 1
        %s1125 = scalar_lea.sflag [#allocation4], %s1124
        %s1126 = sand.u32 %s161, 1
        %s1127 = scalar_lea.vmem [#allocation3], %s1126
        // Predicated region
        $region45: #{tpu_custom_call.1} parent=43 // pred_check
          %p1128 = pneg %p171
        $region46: #{tpu_custom_call.1} parent=43 // pred_check_branch
          %1130 = sbr.rel (%p1128) target = $region48
        $region47: #{tpu_custom_call.1} parent=43 // pred_region
          %1132 = vsyncadd %s1125, 0
          %s1133 = scalar_lea.hbm %s6, %s22
          %s1135 = sshll.u32 %s1127, 4
          %s1136 = int_to_ptr.vmem [resolvable:$true] %s1135
          %s1137 = sshll.u32 %s1133, 4
          %s1138 = int_to_ptr.hbm [resolvable:$true] %s1137
          %1140 = dma.vmem_to_hbm [thread:$0]  %s1136, 16, %s1138, %s1125
        $region48: #{tpu_custom_call.1} parent=43 // pred_fallthru
          _
      $region44: #{tpu_custom_call.1} parent=5 // pred_fallthru
        _
      %p1141 = scmp.le.s32.totalorder 2, %s17
      // Predicated region
      $region49: #{tpu_custom_call.1} parent=5 // pred_check
        %p1142 = pneg %p1141
      $region50: #{tpu_custom_call.1} parent=5 // pred_check_branch
        %1144 = sbr.rel (%p1142) target = $region52
      $region51: #{tpu_custom_call.1} parent=5 // pred_region
        %s1145 = ssub.s32 %s17, 2
        // Predicated region
        $region53: #{tpu_custom_call.1} parent=51 // pred_check
          %p1146 = pneg %p177
        $region54: #{tpu_custom_call.1} parent=51 // pred_check_branch
          %1148 = sbr.rel (%p1146) target = $region56
        $region55: #{tpu_custom_call.1} parent=51 // pred_region
          %s1149 = sand.u32 %s162, 1
          %s1150 = scalar_lea.sflag [#allocation4], %s1149
          %s1151 = sand.u32 %s162, 1
          %s1152 = scalar_lea.vmem [#allocation3], %s1151
          %1154 = dma.done %s1150, 16
        $region56: #{tpu_custom_call.1} parent=51 // pred_fallthru
          _
      $region52: #{tpu_custom_call.1} parent=5 // pred_fallthru
        _
    $region6: #{tpu_custom_call.1} parent=1 // loop_footer
      %s21 = sadd.s32 1, %s17
    $region7: #{tpu_custom_call.1} parent=1 // loop_footer_branch
      %16 = sbr.rel target = $region3
    $region8: #{tpu_custom_call.1} parent=1 // loop_exit
      _
    %1155 = vsyncpa [#allocation4], 1
    %s1156 = scalar_lea.sflag [#allocation4], 1
    %1157 = vsyncpa %s1156, 1

</llo_original>
